<compile_context>
chip_gen: v7x
topology: tpu7x:2x2x1
jax: 0.10.0
libtpu: 0.0.40
codegen_flags: <defaults>
</compile_context>

<pallas_src>
import jax
import jax.numpy as jnp
from jax.experimental import pallas as pl
from jax.experimental.pallas import tpu as pltpu

BN_EPS = 1e-5


def _mtl_kernel(x_ref, w1_ref, b1_ref, wt_ref, bt_ref, out_ref):
    # x_ref : [T*B, F]     w1_ref : [F, S]       b1_ref : [1, S]
    # wt_ref: [T, S, Op]   bt_ref : [T, 1, Op]   out_ref: [T, B, Op]   (Op = 128-padded O)
    T, B, _ = out_ref.shape

    # Shared layer over the whole flattened batch: Linear -> ReLU.
    # (Eval-mode BatchNorm already folded into the tower weights; Dropout == identity.)
    h = jnp.dot(x_ref[...], w1_ref[...], preferred_element_type=jnp.float32)
    h = jnp.maximum(h + b1_ref[...], 0.0)                     # [T*B, S]

    # Split the task axis back out (sublane-aligned split: B == 8, minor dim unchanged).
    h = h.reshape(T, B, h.shape[-1])                          # [T, B, S]

    # Per-task tower: Linear -> ReLU (Dropout == identity), batched over tasks.
    out = jnp.einsum('tbs,tso->tbo', h, wt_ref[...],
                     preferred_element_type=jnp.float32) + bt_ref[...]
    out_ref[...] = jnp.maximum(out, 0.0).astype(out_ref.dtype)


def mtlnet_1layer_forward(x, params):
    """x: [T, B, F] float32; params: dict of weights. Returns list of T arrays [B, O]."""
    T, B, F = x.shape
    S = params["w1"].shape[1]
    O = params["wt"].shape[2]
    O_pad = ((O + 127) // 128) * 128  # lane-dense output (unmasked vst)

    # ---- Fold eval-mode BatchNorm (post-ReLU per-feature affine) into the tower Linear.
    a = params["bn_gamma"] * jax.lax.rsqrt(params["bn_var"] + BN_EPS)               # [1, S]
    c = params["bn_beta"] - params["bn_mean"] * a                                   # [1, S]
    wt_f = a.reshape(1, S, 1) * params["wt"]                                        # [T, S, O]
    bt_f = params["bt"] + jnp.einsum('s,tso->to', c[0], params["wt"])[:, None, :]   # [T, 1, O]

    # ---- Pad the tower output dim to a multiple of 128 lanes (sliced off below).
    wt_p = jnp.pad(wt_f, ((0, 0), (0, 0), (0, O_pad - O)))
    bt_p = jnp.pad(bt_f, ((0, 0), (0, 0), (0, O_pad - O)))

    # ---- Flatten the task-stacked batch for one shared-layer matmul.
    x2d = x.reshape(T * B, F)

    out = pl.pallas_call(
        _mtl_kernel,
        out_shape=jax.ShapeDtypeStruct((T, B, O_pad), jnp.float32),
        in_specs=[pl.BlockSpec(memory_space=pltpu.MemorySpace.VMEM)] * 5,
        out_specs=pl.BlockSpec(memory_space=pltpu.MemorySpace.VMEM),
    )(x2d, params["w1"], params["b1"], wt_p, bt_p)

    out = out[..., :O]                      # drop lane padding
    return [out[i] for i in range(T)]


def init_params(key, feature_size, shared_layer_size, tasks_num, output_size):
    ks = jax.random.split(key, 8)
    return {
        # shared Linear (stored pre-transposed: [in, out])
        "w1": jax.random.normal(ks[0], (feature_size, shared_layer_size), jnp.float32) * 0.1,
        "b1": jax.random.normal(ks[1], (1, shared_layer_size), jnp.float32) * 0.1,
        # BatchNorm1d affine params + running stats (eval mode, non-trivial values)
        "bn_gamma": 1.0 + 0.1 * jax.random.normal(ks[2], (1, shared_layer_size), jnp.float32),
        "bn_beta": 0.1 * jax.random.normal(ks[3], (1, shared_layer_size), jnp.float32),
        "bn_mean": 0.1 * jax.random.normal(ks[4], (1, shared_layer_size), jnp.float32),
        "bn_var": jax.random.uniform(ks[5], (1, shared_layer_size), jnp.float32,
                                     minval=0.5, maxval=1.5),
        # per-task tower Linear (stored pre-transposed: [T, in, out])
        "wt": jax.random.normal(ks[6], (tasks_num, shared_layer_size, output_size),
                                jnp.float32) * 0.1,
        "bt": jax.random.normal(ks[7], (tasks_num, 1, output_size), jnp.float32) * 0.1,
    }


def _reference(x, p):
    """Plain-JAX reference of the eval-mode forward (unfolded BN), for a sanity check."""
    outs = []
    for i in range(x.shape[0]):
        h = jnp.maximum(x[i] @ p["w1"] + p["b1"], 0.0)
        h = (h - p["bn_mean"]) / jnp.sqrt(p["bn_var"] + BN_EPS) * p["bn_gamma"] + p["bn_beta"]
        outs.append(jnp.maximum(h @ p["wt"][i] + p["bt"][i], 0.0))
    return outs


if __name__ == "__main__":
    # Small shapes consistent with the module's forward.
    tasks_num = 3
    batch = 8
    feature_size = 32
    shared_layer_size = 64
    output_size = 8

    key = jax.random.PRNGKey(0)
    kx, kp = jax.random.split(key)
    x = jax.random.normal(kx, (tasks_num, batch, feature_size), jnp.float32)
    params = init_params(kp, feature_size, shared_layer_size, tasks_num, output_size)

    outs = mtlnet_1layer_forward(x, params)
    outs = [jax.block_until_ready(o) for o in outs]

    refs = _reference(x, params)
    for o, r in zip(outs, refs):
        assert o.shape == (batch, output_size)
        assert jnp.max(jnp.abs(o - r)) < 1e-4

    print("KERNEL_OK")
</pallas_src>

<mosaic_0001>
module attributes {stable_mosaic.version = 11 : i64} {
  func.func @_mtl_kernel(%arg0: memref<24x32xf32, #tpu.memory_space<vmem>>, %arg1: memref<32x64xf32, #tpu.memory_space<vmem>>, %arg2: memref<1x64xf32, #tpu.memory_space<vmem>>, %arg3: memref<3x64x128xf32, #tpu.memory_space<vmem>>, %arg4: memref<3x1x128xf32, #tpu.memory_space<vmem>>, %arg5: memref<3x8x128xf32, #tpu.memory_space<vmem>>) attributes {dimension_semantics = [], scalar_prefetch = 0 : i64, scratch_operands = 0 : i64, tpu.core_type = #tpu.core_type<tc>} {
    %c0 = arith.constant 0 : index
    %c0_0 = arith.constant 0 : index
    %0 = vector.load %arg0[%c0, %c0_0] : memref<24x32xf32, #tpu.memory_space<vmem>>, vector<24x32xf32>
    %c0_1 = arith.constant 0 : index
    %c0_2 = arith.constant 0 : index
    %1 = vector.load %arg1[%c0_1, %c0_2] : memref<32x64xf32, #tpu.memory_space<vmem>>, vector<32x64xf32>
    %cst = arith.constant dense<0.000000e+00> : vector<24x64xf32>
    %2 = tpu.matmul %0, %1, %cst {dimension_numbers = #tpu.dot_dimension_numbers<[1], [0], [0], [1], [0, 0, 1, 1], [], []>} : vector<24x32xf32>, vector<32x64xf32>, vector<24x64xf32> -> vector<24x64xf32>
    %c0_3 = arith.constant 0 : index
    %c0_4 = arith.constant 0 : index
    %3 = vector.load %arg2[%c0_3, %c0_4] : memref<1x64xf32, #tpu.memory_space<vmem>>, vector<1x64xf32>
    %4 = vector.broadcast %3 : vector<1x64xf32> to vector<24x64xf32>
    %5 = arith.addf %2, %4 : vector<24x64xf32>
    %cst_5 = arith.constant 0.000000e+00 : f32
    %6 = vector.broadcast %cst_5 : f32 to vector<24x64xf32>
    %7 = arith.maximumf %5, %6 : vector<24x64xf32>
    %8 = vector.shape_cast %7 : vector<24x64xf32> to vector<3x8x64xf32>
    %c0_6 = arith.constant 0 : index
    %c0_7 = arith.constant 0 : index
    %c0_8 = arith.constant 0 : index
    %9 = vector.load %arg3[%c0_6, %c0_7, %c0_8] : memref<3x64x128xf32, #tpu.memory_space<vmem>>, vector<3x64x128xf32>
    "tpu.trace_start"() <{level = 10 : i32, message = "tbs,tso->tbo"}> : () -> ()
    %cst_9 = arith.constant dense<0.000000e+00> : vector<3x8x128xf32>
    %10 = tpu.matmul %8, %9, %cst_9 {dimension_numbers = #tpu.dot_dimension_numbers<[2], [1], [1], [2], [0, 0, 0, 1, 1, 2], [0], [0]>} : vector<3x8x64xf32>, vector<3x64x128xf32>, vector<3x8x128xf32> -> vector<3x8x128xf32>
    "tpu.trace_stop"() : () -> ()
    %c0_10 = arith.constant 0 : index
    %c0_11 = arith.constant 0 : index
    %c0_12 = arith.constant 0 : index
    %11 = vector.load %arg4[%c0_10, %c0_11, %c0_12] : memref<3x1x128xf32, #tpu.memory_space<vmem>>, vector<3x1x128xf32>
    %12 = vector.broadcast %11 : vector<3x1x128xf32> to vector<3x8x128xf32>
    %13 = arith.addf %10, %12 : vector<3x8x128xf32>
    %cst_13 = arith.constant 0.000000e+00 : f32
    %14 = vector.broadcast %cst_13 : f32 to vector<3x8x128xf32>
    %15 = arith.maximumf %13, %14 : vector<3x8x128xf32>
    %c0_14 = arith.constant 0 : index
    %c0_15 = arith.constant 0 : index
    %c0_16 = arith.constant 0 : index
    %16 = vector.load %arg5[%c0_14, %c0_15, %c0_16] : memref<3x8x128xf32, #tpu.memory_space<vmem>>, vector<3x8x128xf32>
    tpu.vector_store %arg5[%c0_14, %c0_15, %c0_16], %15 {strides = array<i32>} : memref<3x8x128xf32, #tpu.memory_space<vmem>>, vector<3x8x128xf32>,
    return
  }
}

</mosaic_0001>

<llo_original>
// kernel: tpu_custom_call.1
$region0: #{tpu_custom_call.1}
  #allocation0 [shape = 'u32[]', space=smem, size = 0x4, offset = 0x4, fixed_abs, tag = 'smem constant byte address 0x4 - core index']
  #allocation1 [shape = 'u32[144,128]{1,0:T(1,128)}', space=vmem, size = 0x12000, scoped, tag = 'internal scratch']
  %s0 = inlined_call_operand.hbm [shape: f32[24,32], index: 0, kind: input, shape index: {}]
  %s1 = inlined_call_operand.hbm [shape: f32[32,64], index: 1, kind: input, shape index: {}]
  %s2 = inlined_call_operand.vmem [shape: f32[1,64], index: 2, kind: input, shape index: {}]
  %s3 = inlined_call_operand.hbm [shape: f32[3,64,128], index: 3, kind: input, shape index: {}]
  %s4 = inlined_call_operand.vmem [shape: f32[3,1,128], index: 4, kind: input, shape index: {}]
  %s5 = inlined_call_operand.hbm [shape: f32[3,8,128], index: 5, kind: output, shape index: {}]
  %s6 = sld [smem:[#allocation0]]
  $region42: #{tpu_custom_call.1} parent=0
    _
  %s8 = ssub.s32 1, %s6
  %s9 = scalar_select 0, %s8, %s6
  $region1: #{tpu_custom_call.1} parent=0
    #allocation2 [shape = 'u8[12288]{0}', space=vmem, size = 0x3000, scoped, tag = 'input window, operand 0, single buffered']
    #allocation3 [shape = 's32[1]{0}', space=sflag, size = 0x4, scoped, tag = 'scoped memory for tpu_custom_call.1']
    #allocation4 [shape = 's32[1]{0}', space=sflag, size = 0x4, scoped, tag = 'scoped memory for tpu_custom_call.1']
    #allocation5 [shape = 'u8[16384]{0}', space=vmem, size = 0x4000, scoped, tag = 'input window, operand 1, single buffered']
    #allocation6 [shape = 's32[1]{0}', space=sflag, size = 0x4, scoped, tag = 'scoped memory for tpu_custom_call.1']
    #allocation7 [shape = 'u8[98304]{0}', space=vmem, size = 0x18000, scoped, tag = 'input window, operand 3, single buffered']
    #allocation8 [shape = 'u8[12288]{0}', space=vmem, size = 0x3000, scoped, tag = 'output window, operand 0, single buffered']
    %10 = vsyncpa [#allocation3], 0
    %11 = vsyncpa [#allocation6], 0
    %12 = vsyncpa [#allocation4], 0
    // Predicated region
    $region2: #{tpu_custom_call.1} parent=1 // pred_check
      _
    $region3: #{tpu_custom_call.1} parent=1 // pred_check_branch
      %14 = sbr.rel (0) target = $region5
    $region4: #{tpu_custom_call.1} parent=1 // pred_region
      %s16 = ssub.s32 384, 384
      %17 = vsyncadd [#allocation3], %s16
      %s18 = sshll.u32 [#allocation2], 4
      %s19 = int_to_ptr.vmem [resolvable:$true] %s18
      %24 = dma.hbm_to_vmem [thread:$0]  %s0, 384, %s19, [#allocation3], 128, 128, 8
    $region5: #{tpu_custom_call.1} parent=1 // pred_fallthru
      _
    // Predicated region
    $region6: #{tpu_custom_call.1} parent=1 // pred_check
      _
    $region7: #{tpu_custom_call.1} parent=1 // pred_check_branch
      %26 = sbr.rel (0) target = $region9
    $region8: #{tpu_custom_call.1} parent=1 // pred_region
      %s28 = ssub.s32 512, 512
      %29 = vsyncadd [#allocation6], %s28
      %s30 = sshll.u32 [#allocation5], 4
      %s31 = int_to_ptr.vmem [resolvable:$true] %s30
      %36 = dma.hbm_to_vmem [thread:$0]  %s1, 512, %s31, [#allocation6], 128, 128, 8
    $region9: #{tpu_custom_call.1} parent=1 // pred_fallthru
      _
    // Predicated region
    $region10: #{tpu_custom_call.1} parent=1 // pred_check
      _
    $region11: #{tpu_custom_call.1} parent=1 // pred_check_branch
      %38 = sbr.rel (0) target = $region13
    $region12: #{tpu_custom_call.1} parent=1 // pred_region
      _
    $region13: #{tpu_custom_call.1} parent=1 // pred_fallthru
      _
    // Predicated region
    $region14: #{tpu_custom_call.1} parent=1 // pred_check
      _
    $region15: #{tpu_custom_call.1} parent=1 // pred_check_branch
      %40 = sbr.rel (0) target = $region17
    $region16: #{tpu_custom_call.1} parent=1 // pred_region
      %s42 = ssub.s32 3072, 3072
      %43 = vsyncadd [#allocation6], %s42
      %s44 = sshll.u32 [#allocation7], 4
      %s45 = int_to_ptr.vmem [resolvable:$true] %s44
      %50 = dma.hbm_to_vmem [thread:$0]  %s3, 3072, %s45, [#allocation6], 128, 128, 8
    $region17: #{tpu_custom_call.1} parent=1 // pred_fallthru
      _
    // Predicated region
    $region18: #{tpu_custom_call.1} parent=1 // pred_check
      _
    $region19: #{tpu_custom_call.1} parent=1 // pred_check_branch
      %52 = sbr.rel (0) target = $region21
    $region20: #{tpu_custom_call.1} parent=1 // pred_region
      _
    $region21: #{tpu_custom_call.1} parent=1 // pred_fallthru
      _
    // Predicated region
    $region22: #{tpu_custom_call.1} parent=1 // pred_check
      _
    $region23: #{tpu_custom_call.1} parent=1 // pred_check_branch
      %54 = sbr.rel (0) target = $region25
    $region24: #{tpu_custom_call.1} parent=1 // pred_region
      %55 = dma.done [#allocation3], 384
    $region25: #{tpu_custom_call.1} parent=1 // pred_fallthru
      _
    // Predicated region
    $region26: #{tpu_custom_call.1} parent=1 // pred_check
      _
    $region27: #{tpu_custom_call.1} parent=1 // pred_check_branch
      %57 = sbr.rel (0) target = $region29
    $region28: #{tpu_custom_call.1} parent=1 // pred_region
      %58 = dma.done [#allocation6], 512
    $region29: #{tpu_custom_call.1} parent=1 // pred_fallthru
      _
    // Predicated region
    $region30: #{tpu_custom_call.1} parent=1 // pred_check
      _
    $region31: #{tpu_custom_call.1} parent=1 // pred_check_branch
      %60 = sbr.rel (0) target = $region33
    $region32: #{tpu_custom_call.1} parent=1 // pred_region
      %61 = dma.done [#allocation6], 3072
    $region33: #{tpu_custom_call.1} parent=1 // pred_fallthru
      _
    %v62 = vld [vmem:[#allocation2] sm:$0xff]
    %v63 = vld [vmem:[#allocation2 + $0x8] sm:$0xff]
    %v64 = vld [vmem:[#allocation2 + $0x10] sm:$0xff]
    %v65 = vld [vmem:[#allocation5] sm:$0xff]
    %v66 = vld [vmem:[#allocation5 + $0x8] sm:$0xff]
    %v67 = vld [vmem:[#allocation5 + $0x10] sm:$0xff]
    %v68 = vld [vmem:[#allocation5 + $0x18] sm:$0xff]
    %v69 = vld [vmem:[%s2] sm:$0x1]
    %v71 = vlaneseq
    %v72 = vshrl.u32 %v71, 7
    %v73 = vsub.s32 0, %v72
    %v74 = vrot.slane %v69, %v73
    %vm76 = vcmask 261120
    %v78 = vsel %vm76, %v62, 0
    %v81 = vsel %vm76, %v63, 0
    %v84 = vsel %vm76, %v64, 0
    %86 = vmatprep.subr.mxu0 0.0
    %87 = vmatpush1.msra.mxu0 %v65
    %88 = vmatprep.subr.mxu0 0.0
    %89 = vmatpush1.msra.mxu0 %v66
    %90 = vmatprep.subr.mxu0 0.0
    %91 = vmatpush1.msra.mxu0 %v67
    %92 = vmatprep.subr.mxu0 0.0
    %93 = vmatpush1.msra.mxu0 %v68
    %94 = vmatprep.subr.mxu0 0.0
    %95 = vmatpush1.msra.mxu0 0.0
    %96 = vmatprep.subr.mxu0 0.0
    %97 = vmatpush1.msra.mxu0 0.0
    %98 = vmatprep.subr.mxu0 0.0
    %99 = vmatpush1.msra.mxu0 0.0
    %100 = vmatprep.subr.mxu0 0.0
    %101 = vmatpush1.msra.mxu0 0.0
    %102 = vmatprep.subr.mxu0 0.0
    %103 = vmatpush1.msra.mxu0 0.0
    %104 = vmatprep.subr.mxu0 0.0
    %105 = vmatpush1.msra.mxu0 0.0
    %106 = vmatprep.subr.mxu0 0.0
    %107 = vmatpush1.msra.mxu0 0.0
    %108 = vmatprep.subr.mxu0 0.0
    %109 = vmatpush1.msra.mxu0 0.0
    %110 = vmatprep.subr.mxu0 0.0
    %111 = vmatpush1.msra.mxu0 0.0
    %112 = vmatprep.subr.mxu0 0.0
    %113 = vmatpush1.msra.mxu0 0.0
    %114 = vmatprep.subr.mxu0 0.0
    %115 = vmatpush1.msra.mxu0 0.0
    %116 = vmatprep.subr.mxu0 0.0
    %117 = vmatpush1.msra.mxu0 0.0
    %118 = vmatprep.subr.mxu0 0.0
    %119 = vmatpush1.msra.mxu0 0.0
    %120 = vmatprep.subr.mxu0 0.0
    %121 = vmatpush1.msra.mxu0 0.0
    %122 = vmatprep.subr.mxu0 0.0
    %123 = vmatpush1.msra.mxu0 0.0
    %124 = vmatprep.subr.mxu0 0.0
    %125 = vmatpush1.msra.mxu0 0.0
    %126 = vmatprep.subr.mxu0 0.0
    %127 = vmatpush1.msra.mxu0 0.0
    %128 = vmatprep.subr.mxu0 0.0
    %129 = vmatpush1.msra.mxu0 0.0
    %130 = vmatprep.subr.mxu0 0.0
    %131 = vmatpush1.msra.mxu0 0.0
    %132 = vmatprep.subr.mxu0 0.0
    %133 = vmatpush1.msra.mxu0 0.0
    %134 = vmatprep.subr.mxu0 0.0
    %135 = vmatpush1.msra.mxu0 0.0
    %136 = vmatprep.subr.mxu0 0.0
    %137 = vmatpush1.msra.mxu0 0.0
    %138 = vmatprep.subr.mxu0 0.0
    %139 = vmatpush1.msra.mxu0 0.0
    %140 = vmatprep.subr.mxu0 0.0
    %141 = vmatpush1.msra.mxu0 0.0
    %142 = vmatprep.subr.mxu0 0.0
    %143 = vmatpush1.msra.mxu0 0.0
    %144 = vmatprep.subr.mxu0 0.0
    %145 = vmatpush1.msra.mxu0 0.0
    %146 = vmatprep.subr.mxu0 0.0
    %147 = vmatpush1.msra.mxu0 0.0
    %148 = vmatprep.subr.mxu0 0.0
    %149 = vmatpush1.msra.mxu0 0.0
    %150 = vmatprep.mubr.f32.mxu0 0.0
    %151 = vmatmul.mubr.f32.gmra.mrb[0].mxu0 %v78
    %v152 = vpop.f32.mrb[0].mxu0
    %v153 = vadd.f32 %v74, %v152
    %v154 = vpop.f32.mrb[0].mxu0
    %155 = vmatprep.mubr.f32.mxu0 0.0
    %156 = vmatmul.mubr.f32.gmra.mrb[0].mxu0 %v81
    %v157 = vpop.f32.mrb[0].mxu0
    %v158 = vadd.f32 %v74, %v157
    %v159 = vpop.f32.mrb[0].mxu0
    %160 = vmatprep.mubr.f32.mxu0 0.0
    %161 = vmatmul.mubr.f32.gmra.mrb[0].mxu0 %v84
    %v162 = vpop.f32.mrb[0].mxu0
    %v163 = vadd.f32 %v74, %v162
    %v164 = vpop.f32.mrb[0].mxu0
    %165 = vdwg.mxu0
    %v166 = vmax.f32 %v153, 0.0
    %v167 = vmax.f32 %v158, 0.0
    %v168 = vmax.f32 %v163, 0.0
    %v169 = vld [vmem:[#allocation7] sm:$0xff]
    %v170 = vld [vmem:[#allocation7 + $0x8] sm:$0xff]
    %v171 = vld [vmem:[#allocation7 + $0x10] sm:$0xff]
    %v172 = vld [vmem:[#allocation7 + $0x18] sm:$0xff]
    %v173 = vld [vmem:[#allocation7 + $0x20] sm:$0xff]
    %v174 = vld [vmem:[#allocation7 + $0x28] sm:$0xff]
    %v175 = vld [vmem:[#allocation7 + $0x30] sm:$0xff]
    %v176 = vld [vmem:[#allocation7 + $0x38] sm:$0xff]
    %v177 = vld [vmem:[#allocation7 + $0x40] sm:$0xff]
    %v178 = vld [vmem:[#allocation7 + $0x48] sm:$0xff]
    %v179 = vld [vmem:[#allocation7 + $0x50] sm:$0xff]
    %v180 = vld [vmem:[#allocation7 + $0x58] sm:$0xff]
    %v181 = vld [vmem:[#allocation7 + $0x60] sm:$0xff]
    %v182 = vld [vmem:[#allocation7 + $0x68] sm:$0xff]
    %v183 = vld [vmem:[#allocation7 + $0x70] sm:$0xff]
    %v184 = vld [vmem:[#allocation7 + $0x78] sm:$0xff]
    %v185 = vld [vmem:[#allocation7 + $0x80] sm:$0xff]
    %v186 = vld [vmem:[#allocation7 + $0x88] sm:$0xff]
    %v187 = vld [vmem:[#allocation7 + $0x90] sm:$0xff]
    %v188 = vld [vmem:[#allocation7 + $0x98] sm:$0xff]
    %v189 = vld [vmem:[#allocation7 + $0xa0] sm:$0xff]
    %v190 = vld [vmem:[#allocation7 + $0xa8] sm:$0xff]
    %v191 = vld [vmem:[#allocation7 + $0xb0] sm:$0xff]
    %v192 = vld [vmem:[#allocation7 + $0xb8] sm:$0xff]
    %v193 = vld [vmem:[%s4] sm:$0x1]
    %v194 = vld [vmem:[%s4 + $0x1] sm:$0x1]
    %v195 = vld [vmem:[%s4 + $0x2] sm:$0x1]
    %v199 = vlaneseq
    %v200 = vshrl.u32 %v199, 7
    %v201 = vsub.s32 0, %v200
    %v202 = vrot.slane %v193, %v201
    %v203 = vlaneseq
    %v204 = vshrl.u32 %v203, 7
    %v205 = vsub.s32 0, %v204
    %v206 = vrot.slane %v194, %v205
    %v207 = vlaneseq
    %v208 = vshrl.u32 %v207, 7
    %v209 = vsub.s32 0, %v208
    %v210 = vrot.slane %v195, %v209
    %vm214 = vcmask 523264
    %v216 = vsel %vm214, %v166, 0
    %218 = vmatprep.subr.mxu0 0.0
    %219 = vmatpush1.msra.mxu0 %v169
    %220 = vmatprep.subr.mxu0 0.0
    %221 = vmatpush1.msra.mxu0 %v170
    %222 = vmatprep.subr.mxu0 0.0
    %223 = vmatpush1.msra.mxu0 %v171
    %224 = vmatprep.subr.mxu0 0.0
    %225 = vmatpush1.msra.mxu0 %v172
    %226 = vmatprep.subr.mxu0 0.0
    %227 = vmatpush1.msra.mxu0 %v173
    %228 = vmatprep.subr.mxu0 0.0
    %229 = vmatpush1.msra.mxu0 %v174
    %230 = vmatprep.subr.mxu0 0.0
    %231 = vmatpush1.msra.mxu0 %v175
    %232 = vmatprep.subr.mxu0 0.0
    %233 = vmatpush1.msra.mxu0 %v176
    %234 = vmatprep.subr.mxu0 0.0
    %235 = vmatpush1.msra.mxu0 0.0
    %236 = vmatprep.subr.mxu0 0.0
    %237 = vmatpush1.msra.mxu0 0.0
    %238 = vmatprep.subr.mxu0 0.0
    %239 = vmatpush1.msra.mxu0 0.0
    %240 = vmatprep.subr.mxu0 0.0
    %241 = vmatpush1.msra.mxu0 0.0
    %242 = vmatprep.subr.mxu0 0.0
    %243 = vmatpush1.msra.mxu0 0.0
    %244 = vmatprep.subr.mxu0 0.0
    %245 = vmatpush1.msra.mxu0 0.0
    %246 = vmatprep.subr.mxu0 0.0
    %247 = vmatpush1.msra.mxu0 0.0
    %248 = vmatprep.subr.mxu0 0.0
    %249 = vmatpush1.msra.mxu0 0.0
    %250 = vmatprep.subr.mxu0 0.0
    %251 = vmatpush1.msra.mxu0 0.0
    %252 = vmatprep.subr.mxu0 0.0
    %253 = vmatpush1.msra.mxu0 0.0
    %254 = vmatprep.subr.mxu0 0.0
    %255 = vmatpush1.msra.mxu0 0.0
    %256 = vmatprep.subr.mxu0 0.0
    %257 = vmatpush1.msra.mxu0 0.0
    %258 = vmatprep.subr.mxu0 0.0
    %259 = vmatpush1.msra.mxu0 0.0
    %260 = vmatprep.subr.mxu0 0.0
    %261 = vmatpush1.msra.mxu0 0.0
    %262 = vmatprep.subr.mxu0 0.0
    %263 = vmatpush1.msra.mxu0 0.0
    %264 = vmatprep.subr.mxu0 0.0
    %265 = vmatpush1.msra.mxu0 0.0
    %266 = vmatprep.subr.mxu0 0.0
    %267 = vmatpush1.msra.mxu0 0.0
    %268 = vmatprep.subr.mxu0 0.0
    %269 = vmatpush1.msra.mxu0 0.0
    %270 = vmatprep.subr.mxu0 0.0
    %271 = vmatpush1.msra.mxu0 0.0
    %272 = vmatprep.subr.mxu0 0.0
    %273 = vmatpush1.msra.mxu0 0.0
    %274 = vmatprep.subr.mxu0 0.0
    %275 = vmatpush1.msra.mxu0 0.0
    %276 = vmatprep.subr.mxu0 0.0
    %277 = vmatpush1.msra.mxu0 0.0
    %278 = vmatprep.subr.mxu0 0.0
    %279 = vmatpush1.msra.mxu0 0.0
    %280 = vmatprep.subr.mxu0 0.0
    %281 = vmatpush1.msra.mxu0 0.0
    %282 = vmatprep.mubr.f32.mxu0 0.0
    %283 = vmatmul.mubr.f32.gmra.mrb[0].mxu0 %v216
    %v284 = vpop.f32.mrb[0].mxu0
    %v285 = vadd.f32 %v202, %v284
    %v286 = vpop.f32.mrb[0].mxu0
    %287 = vdwg.mxu0
    %v289 = vsel %vm214, %v167, 0
    %291 = vmatprep.subr.mxu0 0.0
    %292 = vmatpush1.msra.mxu0 %v177
    %293 = vmatprep.subr.mxu0 0.0
    %294 = vmatpush1.msra.mxu0 %v178
    %295 = vmatprep.subr.mxu0 0.0
    %296 = vmatpush1.msra.mxu0 %v179
    %297 = vmatprep.subr.mxu0 0.0
    %298 = vmatpush1.msra.mxu0 %v180
    %299 = vmatprep.subr.mxu0 0.0
    %300 = vmatpush1.msra.mxu0 %v181
    %301 = vmatprep.subr.mxu0 0.0
    %302 = vmatpush1.msra.mxu0 %v182
    %303 = vmatprep.subr.mxu0 0.0
    %304 = vmatpush1.msra.mxu0 %v183
    %305 = vmatprep.subr.mxu0 0.0
    %306 = vmatpush1.msra.mxu0 %v184
    %307 = vmatprep.subr.mxu0 0.0
    %308 = vmatpush1.msra.mxu0 0.0
    %309 = vmatprep.subr.mxu0 0.0
    %310 = vmatpush1.msra.mxu0 0.0
    %311 = vmatprep.subr.mxu0 0.0
    %312 = vmatpush1.msra.mxu0 0.0
    %313 = vmatprep.subr.mxu0 0.0
    %314 = vmatpush1.msra.mxu0 0.0
    %315 = vmatprep.subr.mxu0 0.0
    %316 = vmatpush1.msra.mxu0 0.0
    %317 = vmatprep.subr.mxu0 0.0
    %318 = vmatpush1.msra.mxu0 0.0
    %319 = vmatprep.subr.mxu0 0.0
    %320 = vmatpush1.msra.mxu0 0.0
    %321 = vmatprep.subr.mxu0 0.0
    %322 = vmatpush1.msra.mxu0 0.0
    %323 = vmatprep.subr.mxu0 0.0
    %324 = vmatpush1.msra.mxu0 0.0
    %325 = vmatprep.subr.mxu0 0.0
    %326 = vmatpush1.msra.mxu0 0.0
    %327 = vmatprep.subr.mxu0 0.0
    %328 = vmatpush1.msra.mxu0 0.0
    %329 = vmatprep.subr.mxu0 0.0
    %330 = vmatpush1.msra.mxu0 0.0
    %331 = vmatprep.subr.mxu0 0.0
    %332 = vmatpush1.msra.mxu0 0.0
    %333 = vmatprep.subr.mxu0 0.0
    %334 = vmatpush1.msra.mxu0 0.0
    %335 = vmatprep.subr.mxu0 0.0
    %336 = vmatpush1.msra.mxu0 0.0
    %337 = vmatprep.subr.mxu0 0.0
    %338 = vmatpush1.msra.mxu0 0.0
    %339 = vmatprep.subr.mxu0 0.0
    %340 = vmatpush1.msra.mxu0 0.0
    %341 = vmatprep.subr.mxu0 0.0
    %342 = vmatpush1.msra.mxu0 0.0
    %343 = vmatprep.subr.mxu0 0.0
    %344 = vmatpush1.msra.mxu0 0.0
    %345 = vmatprep.subr.mxu0 0.0
    %346 = vmatpush1.msra.mxu0 0.0
    %347 = vmatprep.subr.mxu0 0.0
    %348 = vmatpush1.msra.mxu0 0.0
    %349 = vmatprep.subr.mxu0 0.0
    %350 = vmatpush1.msra.mxu0 0.0
    %351 = vmatprep.subr.mxu0 0.0
    %352 = vmatpush1.msra.mxu0 0.0
    %353 = vmatprep.subr.mxu0 0.0
    %354 = vmatpush1.msra.mxu0 0.0
    %355 = vmatprep.mubr.f32.mxu0 0.0
    %356 = vmatmul.mubr.f32.gmra.mrb[0].mxu0 %v289
    %v357 = vpop.f32.mrb[0].mxu0
    %v358 = vadd.f32 %v206, %v357
    %v359 = vpop.f32.mrb[0].mxu0
    %360 = vdwg.mxu0
    %v362 = vsel %vm214, %v168, 0
    %364 = vmatprep.subr.mxu0 0.0
    %365 = vmatpush1.msra.mxu0 %v185
    %366 = vmatprep.subr.mxu0 0.0
    %367 = vmatpush1.msra.mxu0 %v186
    %368 = vmatprep.subr.mxu0 0.0
    %369 = vmatpush1.msra.mxu0 %v187
    %370 = vmatprep.subr.mxu0 0.0
    %371 = vmatpush1.msra.mxu0 %v188
    %372 = vmatprep.subr.mxu0 0.0
    %373 = vmatpush1.msra.mxu0 %v189
    %374 = vmatprep.subr.mxu0 0.0
    %375 = vmatpush1.msra.mxu0 %v190
    %376 = vmatprep.subr.mxu0 0.0
    %377 = vmatpush1.msra.mxu0 %v191
    %378 = vmatprep.subr.mxu0 0.0
    %379 = vmatpush1.msra.mxu0 %v192
    %380 = vmatprep.subr.mxu0 0.0
    %381 = vmatpush1.msra.mxu0 0.0
    %382 = vmatprep.subr.mxu0 0.0
    %383 = vmatpush1.msra.mxu0 0.0
    %384 = vmatprep.subr.mxu0 0.0
    %385 = vmatpush1.msra.mxu0 0.0
    %386 = vmatprep.subr.mxu0 0.0
    %387 = vmatpush1.msra.mxu0 0.0
    %388 = vmatprep.subr.mxu0 0.0
    %389 = vmatpush1.msra.mxu0 0.0
    %390 = vmatprep.subr.mxu0 0.0
    %391 = vmatpush1.msra.mxu0 0.0
    %392 = vmatprep.subr.mxu0 0.0
    %393 = vmatpush1.msra.mxu0 0.0
    %394 = vmatprep.subr.mxu0 0.0
    %395 = vmatpush1.msra.mxu0 0.0
    %396 = vmatprep.subr.mxu0 0.0
    %397 = vmatpush1.msra.mxu0 0.0
    %398 = vmatprep.subr.mxu0 0.0
    %399 = vmatpush1.msra.mxu0 0.0
    %400 = vmatprep.subr.mxu0 0.0
    %401 = vmatpush1.msra.mxu0 0.0
    %402 = vmatprep.subr.mxu0 0.0
    %403 = vmatpush1.msra.mxu0 0.0
    %404 = vmatprep.subr.mxu0 0.0
    %405 = vmatpush1.msra.mxu0 0.0
    %406 = vmatprep.subr.mxu0 0.0
    %407 = vmatpush1.msra.mxu0 0.0
    %408 = vmatprep.subr.mxu0 0.0
    %409 = vmatpush1.msra.mxu0 0.0
    %410 = vmatprep.subr.mxu0 0.0
    %411 = vmatpush1.msra.mxu0 0.0
    %412 = vmatprep.subr.mxu0 0.0
    %413 = vmatpush1.msra.mxu0 0.0
    %414 = vmatprep.subr.mxu0 0.0
    %415 = vmatpush1.msra.mxu0 0.0
    %416 = vmatprep.subr.mxu0 0.0
    %417 = vmatpush1.msra.mxu0 0.0
    %418 = vmatprep.subr.mxu0 0.0
    %419 = vmatpush1.msra.mxu0 0.0
    %420 = vmatprep.subr.mxu0 0.0
    %421 = vmatpush1.msra.mxu0 0.0
    %422 = vmatprep.subr.mxu0 0.0
    %423 = vmatpush1.msra.mxu0 0.0
    %424 = vmatprep.subr.mxu0 0.0
    %425 = vmatpush1.msra.mxu0 0.0
    %426 = vmatprep.subr.mxu0 0.0
    %427 = vmatpush1.msra.mxu0 0.0
    %428 = vmatprep.mubr.f32.mxu0 0.0
    %429 = vmatmul.mubr.f32.gmra.mrb[0].mxu0 %v362
    %v430 = vpop.f32.mrb[0].mxu0
    %v431 = vadd.f32 %v210, %v430
    %v432 = vpop.f32.mrb[0].mxu0
    %433 = vdwg.mxu0
    %v434 = vmax.f32 %v285, 0.0
    %v435 = vmax.f32 %v358, 0.0
    %v436 = vmax.f32 %v431, 0.0
    %437 = vst [vmem:[#allocation8] sm:$0xff] %v434
    %438 = vst [vmem:[#allocation8 + $0x8] sm:$0xff] %v435
    %439 = vst [vmem:[#allocation8 + $0x10] sm:$0xff] %v436
    // Predicated region
    $region34: #{tpu_custom_call.1} parent=1 // pred_check
      _
    $region35: #{tpu_custom_call.1} parent=1 // pred_check_branch
      %441 = sbr.rel (0) target = $region37
    $region36: #{tpu_custom_call.1} parent=1 // pred_region
      %s443 = ssub.s32 384, 384
      %444 = vsyncadd [#allocation4], %s443
      %s445 = sshll.u32 [#allocation8], 4
      %s446 = int_to_ptr.vmem [resolvable:$true] %s445
      %451 = dma.vmem_to_hbm [thread:$0]  %s446, 384, %s5, [#allocation4], 128, 128, 8
    $region37: #{tpu_custom_call.1} parent=1 // pred_fallthru
      _
    // Predicated region
    $region38: #{tpu_custom_call.1} parent=1 // pred_check
      _
    $region39: #{tpu_custom_call.1} parent=1 // pred_check_branch
      %453 = sbr.rel (0) target = $region41
    $region40: #{tpu_custom_call.1} parent=1 // pred_region
      %454 = dma.done [#allocation4], 384
    $region41: #{tpu_custom_call.1} parent=1 // pred_fallthru
      _
    %455 = vsyncpa [#allocation3], 1
    %456 = vsyncpa [#allocation6], 1
    %457 = vsyncpa [#allocation4], 1

</llo_original>
